<compile_context>
chip_gen: v5e
topology: v5e:2x2
jax: 0.10.0
libtpu: 0.0.40
codegen_flags: <defaults>
</compile_context>

<pallas_src>
import jax
import jax.numpy as jnp
from jax import lax
from jax.experimental import pallas as pl
from jax.experimental.pallas import tpu as pltpu

# ----------------------------- configuration -------------------------------
BATCH = 2
C_IN = 4
C_OUT = 8
K = 3           # kernel_size
STRIDE = 1      # only stride=1 supported in this kernel
DIL = 1         # dilation
PAD = DIL * (K - 1) // 2        # so L_out == L (no interpolation branch)
L = 16
L_PAD = L + 2 * PAD
L_OUT = L_PAD - DIL * (K - 1)   # == L with the padding above
ROWS = BATCH * L_OUT
EPS = 1e-5
assert STRIDE == 1
assert L_OUT == L
assert K % 2 == 1               # residual fusion relies on the center tap

# packed weight-slab row layout (all block starts sublane-aligned)
W1_OFF = 0                                        # (K*C_IN, 2*C_OUT) conv1 + downsample
W2_OFF = ((K * C_IN + 7) // 8) * 8                # 16 : (K*C_OUT, C_OUT) conv2 im2col
VEC_OFF = W2_OFF + ((K * C_OUT + 7) // 8) * 8     # 40 : rows s1, t1, s2, t2, bd
SLAB_ROWS = ((VEC_OFF + 5 + 7) // 8) * 8          # 48
SLAB_COLS = 2 * C_OUT                             # 16


# ------------------------------ Pallas kernel ------------------------------
def temporal_block_kernel(x_ref, w_ref, out_ref):
    # x_ref  : (ROWS, K*C_IN)        conv1 im2col of padded input (built in wrapper)
    # w_ref  : (SLAB_ROWS, 2*C_OUT)  packed weights + folded-BN vectors (1 DMA)
    # out_ref: (ROWS, C_OUT)
    s1 = w_ref[VEC_OFF + 0:VEC_OFF + 1, 0:C_OUT]
    t1 = w_ref[VEC_OFF + 1:VEC_OFF + 2, 0:C_OUT]
    s2 = w_ref[VEC_OFF + 2:VEC_OFF + 3, 0:C_OUT]
    t2 = w_ref[VEC_OFF + 3:VEC_OFF + 4, 0:C_OUT]
    bd = w_ref[VEC_OFF + 4:VEC_OFF + 5, 0:C_OUT]

    # ---- conv1 + residual 1x1 in ONE MXU push --------------------------------
    # columns 0..C_OUT-1   : conv1 (pre-BN)
    # columns C_OUT..2C-1  : 1x1 downsample of the unpadded input (= center tap)
    fused = jnp.dot(x_ref[...], w_ref[W1_OFF:W1_OFF + K * C_IN, :],
                    preferred_element_type=jnp.float32)          # (ROWS, 2*C_OUT)
    h1 = jnp.maximum(fused[:, 0:C_OUT] * s1 + t1, 0.0)           # folded BN1 + ReLU
    res = fused[:, C_OUT:2 * C_OUT] + bd

    # ---- conv2: taps = sublane rolls of h1 + batch-boundary masks ------------
    pos = lax.broadcasted_iota(jnp.int32, (ROWS, 1), 0) % L_OUT  # within-batch index
    h2 = jnp.zeros((ROWS, C_OUT), jnp.float32)
    for k in range(K):
        sft = k * DIL - PAD                        # tap reads h1[t + sft]
        if sft == 0:
            tap = h1
        else:
            tap = pltpu.roll(h1, (-sft) % ROWS, axis=0)          # XLU, off the VALU path
            valid = (pos >= -sft) & (pos < L_OUT - sft)
            tap = jnp.where(valid, tap, 0.0)
        wk = w_ref[W2_OFF + k * C_OUT:W2_OFF + (k + 1) * C_OUT, 0:C_OUT]
        h2 = h2 + jnp.dot(tap, wk, preferred_element_type=jnp.float32)
    h2 = jnp.maximum(h2 * s2 + t2, 0.0)                           # folded BN2 + ReLU

    out_ref[...] = jnp.maximum(h2 + res, 0.0).astype(out_ref.dtype)


# ------------------------------- wrapper ------------------------------------
@jax.jit
def temporal_block_pallas(x_ncl, w1, b1, g1, be1, m1, v1,
                          w2, b2, g2, be2, m2, v2, wd, bd):
    """x_ncl: (N, C_IN, L) like PyTorch. Returns (N, C_OUT, L_OUT)."""
    # layout + conv1 im2col hoisted out of the kernel (fuses with transpose/pad)
    x_nlc = jnp.transpose(x_ncl, (0, 2, 1)).astype(jnp.float32)   # NCL -> NLC
    xpad = jnp.pad(x_nlc, ((0, 0), (PAD, PAD), (0, 0)))
    x_cat = jnp.concatenate(
        [xpad[:, k * DIL:k * DIL + L_OUT, :] for k in range(K)],
        axis=2).reshape(ROWS, K * C_IN)                           # col = k*C_IN + cin

    # PyTorch Conv1d weight (Cout, Cin, K) -> im2col layout (K*Cin, Cout)
    w1_cat = jnp.transpose(w1, (2, 1, 0)).reshape(K * C_IN, C_OUT)
    w2_cat = jnp.transpose(w2, (2, 1, 0)).reshape(K * C_OUT, C_OUT)
    wd_t = jnp.transpose(wd[:, :, 0], (1, 0))                     # (C_IN, C_OUT)

    # fold BN (eval mode) with the preceding conv bias: y = (conv+b)*s + (be - s*m)
    s1 = g1 / jnp.sqrt(v1 + EPS)
    t1 = be1 + s1 * (b1 - m1)
    s2 = g2 / jnp.sqrt(v2 + EPS)
    t2 = be2 + s2 * (b2 - m2)
    vecs = jnp.stack([s1, t1, s2, t2, bd], axis=0)                # (5, C_OUT)

    # residual 1x1 fused into conv1: wd goes in the center-tap rows of the
    # extra C_OUT output columns (zeros elsewhere)
    kc = (K - 1) // 2
    w1_res = jnp.zeros((K * C_IN, C_OUT), jnp.float32).at[
        kc * C_IN:(kc + 1) * C_IN, :].set(wd_t)
    w1_fused = jnp.concatenate([w1_cat, w1_res], axis=1)          # (K*C_IN, 2*C_OUT)

    # pack everything into a single slab -> one input DMA descriptor
    slab = jnp.zeros((SLAB_ROWS, SLAB_COLS), jnp.float32)
    slab = slab.at[W1_OFF:W1_OFF + K * C_IN, :].set(w1_fused)
    slab = slab.at[W2_OFF:W2_OFF + K * C_OUT, 0:C_OUT].set(w2_cat)
    slab = slab.at[VEC_OFF:VEC_OFF + 5, 0:C_OUT].set(vecs)

    vmem = pl.BlockSpec(memory_space=pltpu.MemorySpace.VMEM)      # whole array in VMEM
    out_flat = pl.pallas_call(
        temporal_block_kernel,
        out_shape=jax.ShapeDtypeStruct((ROWS, C_OUT), jnp.float32),
        in_specs=[vmem, vmem],
        out_specs=vmem,
    )(x_cat, slab)

    out_nlc = out_flat.reshape(BATCH, L_OUT, C_OUT)
    return jnp.transpose(out_nlc, (0, 2, 1))                      # NLC -> NCL


# ------------------------- pure-JAX reference (NCL) -------------------------
def ref_forward(x, w1, b1, g1, be1, m1, v1, w2, b2, g2, be2, m2, v2, wd, bd):
    def conv1d(x, w, b, pad, dil):
        y = jax.lax.conv_general_dilated(
            x, w, window_strides=(1,), padding=[(pad, pad)],
            rhs_dilation=(dil,), dimension_numbers=("NCH", "OIH", "NCH"))
        return y + b[None, :, None]

    def bn(x, g, be, m, v):
        return (x - m[None, :, None]) / jnp.sqrt(v + EPS)[None, :, None] \
               * g[None, :, None] + be[None, :, None]

    h = jnp.maximum(bn(conv1d(x, w1, b1, PAD, DIL), g1, be1, m1, v1), 0.0)
    h = jnp.maximum(bn(conv1d(h, w2, b2, PAD, DIL), g2, be2, m2, v2), 0.0)
    res = conv1d(x, wd, bd, 0, 1)
    return jnp.maximum(h + res, 0.0)


# ---------------------------------- main ------------------------------------
if __name__ == "__main__":
    key = jax.random.PRNGKey(0)
    ks = jax.random.split(key, 16)

    x = jax.random.normal(ks[0], (BATCH, C_IN, L), jnp.float32)

    w1 = jax.random.normal(ks[1], (C_OUT, C_IN, K), jnp.float32) * 0.2
    b1 = jax.random.normal(ks[2], (C_OUT,), jnp.float32) * 0.1
    g1 = 1.0 + 0.1 * jax.random.normal(ks[3], (C_OUT,), jnp.float32)
    be1 = 0.1 * jax.random.normal(ks[4], (C_OUT,), jnp.float32)
    m1 = 0.1 * jax.random.normal(ks[5], (C_OUT,), jnp.float32)
    v1 = 1.0 + 0.1 * jax.random.uniform(ks[6], (C_OUT,), jnp.float32)

    w2 = jax.random.normal(ks[7], (C_OUT, C_OUT, K), jnp.float32) * 0.2
    b2 = jax.random.normal(ks[8], (C_OUT,), jnp.float32) * 0.1
    g2 = 1.0 + 0.1 * jax.random.normal(ks[9], (C_OUT,), jnp.float32)
    be2 = 0.1 * jax.random.normal(ks[10], (C_OUT,), jnp.float32)
    m2 = 0.1 * jax.random.normal(ks[11], (C_OUT,), jnp.float32)
    v2 = 1.0 + 0.1 * jax.random.uniform(ks[12], (C_OUT,), jnp.float32)

    wd = jax.random.normal(ks[13], (C_OUT, C_IN, 1), jnp.float32) * 0.3
    bd = jax.random.normal(ks[14], (C_OUT,), jnp.float32) * 0.1

    params = (w1, b1, g1, be1, m1, v1, w2, b2, g2, be2, m2, v2, wd, bd)

    out = temporal_block_pallas(x, *params)
    out = jax.block_until_ready(out)

    ref = ref_forward(x, *params)
    assert out.shape == (BATCH, C_OUT, L_OUT), out.shape
    # MXU f32 matmuls lower to multi-pass bf16; 1e-3 leaves headroom.
    assert jnp.allclose(out, ref, atol=1e-3, rtol=1e-3), \
        float(jnp.max(jnp.abs(out - ref)))

    print("KERNEL_OK")
</pallas_src>

<mosaic_0001>
module attributes {stable_mosaic.version = 11 : i64} {
  func.func @temporal_block_kernel(%arg0: memref<32x12xf32, #tpu.memory_space<vmem>>, %arg1: memref<48x16xf32, #tpu.memory_space<vmem>>, %arg2: memref<32x8xf32, #tpu.memory_space<vmem>>) attributes {dimension_semantics = [], scalar_prefetch = 0 : i64, scratch_operands = 0 : i64, tpu.core_type = #tpu.core_type<tc>} {
    %c40 = arith.constant 40 : index
    %c0 = arith.constant 0 : index
    %0 = vector.load %arg1[%c40, %c0] : memref<48x16xf32, #tpu.memory_space<vmem>>, vector<1x8xf32>
    %c41 = arith.constant 41 : index
    %c0_0 = arith.constant 0 : index
    %1 = vector.load %arg1[%c41, %c0_0] : memref<48x16xf32, #tpu.memory_space<vmem>>, vector<1x8xf32>
    %c42 = arith.constant 42 : index
    %c0_1 = arith.constant 0 : index
    %2 = vector.load %arg1[%c42, %c0_1] : memref<48x16xf32, #tpu.memory_space<vmem>>, vector<1x8xf32>
    %c43 = arith.constant 43 : index
    %c0_2 = arith.constant 0 : index
    %3 = vector.load %arg1[%c43, %c0_2] : memref<48x16xf32, #tpu.memory_space<vmem>>, vector<1x8xf32>
    %c44 = arith.constant 44 : index
    %c0_3 = arith.constant 0 : index
    %4 = vector.load %arg1[%c44, %c0_3] : memref<48x16xf32, #tpu.memory_space<vmem>>, vector<1x8xf32>
    %c0_4 = arith.constant 0 : index
    %c0_5 = arith.constant 0 : index
    %5 = vector.load %arg0[%c0_4, %c0_5] : memref<32x12xf32, #tpu.memory_space<vmem>>, vector<32x12xf32>
    %c0_6 = arith.constant 0 : index
    %c0_7 = arith.constant 0 : index
    %6 = vector.load %arg1[%c0_6, %c0_7] : memref<48x16xf32, #tpu.memory_space<vmem>>, vector<12x16xf32>
    %cst = arith.constant dense<0.000000e+00> : vector<32x16xf32>
    %7 = tpu.matmul %5, %6, %cst {dimension_numbers = #tpu.dot_dimension_numbers<[1], [0], [0], [1], [0, 0, 1, 1], [], []>} : vector<32x12xf32>, vector<12x16xf32>, vector<32x16xf32> -> vector<32x16xf32>
    %8 = vector.extract_strided_slice %7 {offsets = [0, 0], sizes = [32, 8], strides = [1, 1]} : vector<32x16xf32> to vector<32x8xf32>
    %9 = vector.broadcast %0 : vector<1x8xf32> to vector<32x8xf32>
    %10 = arith.mulf %8, %9 : vector<32x8xf32>
    %11 = vector.broadcast %1 : vector<1x8xf32> to vector<32x8xf32>
    %12 = arith.addf %10, %11 : vector<32x8xf32>
    %cst_8 = arith.constant 0.000000e+00 : f32
    %13 = vector.broadcast %cst_8 : f32 to vector<32x8xf32>
    %14 = arith.maximumf %12, %13 : vector<32x8xf32>
    %15 = vector.extract_strided_slice %7 {offsets = [0, 8], sizes = [32, 8], strides = [1, 1]} : vector<32x16xf32> to vector<32x8xf32>
    %16 = vector.broadcast %4 : vector<1x8xf32> to vector<32x8xf32>
    %17 = arith.addf %15, %16 : vector<32x8xf32>
    %18 = tpu.iota {dimensions = array<i32: 0>} : vector<32x1xi32>
    %c16_i32 = arith.constant 16 : i32
    %c0_i32 = arith.constant 0 : i32
    %19 = arith.cmpi eq, %c16_i32, %c0_i32 : i32
    %c1_i32 = arith.constant 1 : i32
    %20 = arith.select %19, %c1_i32, %c16_i32 : i32
    %21 = vector.broadcast %20 : i32 to vector<32x1xi32>
    %22 = arith.remsi %18, %21 : vector<32x1xi32>
    %c0_i32_9 = arith.constant 0 : i32
    %23 = vector.broadcast %c0_i32_9 : i32 to vector<32x1xi32>
    %24 = arith.cmpi ne, %22, %23 : vector<32x1xi32>
    %c0_i32_10 = arith.constant 0 : i32
    %25 = vector.broadcast %c0_i32_10 : i32 to vector<32x1xi32>
    %26 = arith.cmpi slt, %22, %25 : vector<32x1xi32>
    %c0_i32_11 = arith.constant 0 : i32
    %27 = arith.cmpi slt, %20, %c0_i32_11 : i32
    %28 = vector.broadcast %27 : i1 to vector<32x1xi1>
    %29 = vector.broadcast %28 : vector<32x1xi1> to vector<32x1xi1>
    %30 = arith.xori %26, %29 : vector<32x1xi1>
    %31 = arith.andi %30, %24 : vector<32x1xi1>
    %32 = vector.broadcast %20 : i32 to vector<32x1xi32>
    %33 = arith.addi %22, %32 : vector<32x1xi32>
    %34 = arith.select %31, %33, %22 : vector<32x1xi1>, vector<32x1xi32>
    %cst_12 = arith.constant 0.000000e+00 : f32
    %35 = vector.broadcast %cst_12 : f32 to vector<32x8xf32>
    %c1_i32_13 = arith.constant 1 : i32
    %36 = tpu.dynamic_rotate %14 by %c1_i32_13 dim 0 : vector<32x8xf32>, i32 -> vector<32x8xf32>
    %c1_i32_14 = arith.constant 1 : i32
    %37 = vector.broadcast %c1_i32_14 : i32 to vector<32x1xi32>
    %38 = arith.cmpi sge, %34, %37 : vector<32x1xi32>
    %c17_i32 = arith.constant 17 : i32
    %39 = vector.broadcast %c17_i32 : i32 to vector<32x1xi32>
    %40 = arith.cmpi slt, %34, %39 : vector<32x1xi32>
    %41 = arith.andi %38, %40 : vector<32x1xi1>
    %cst_15 = arith.constant 0.000000e+00 : f32
    %42 = vector.shape_cast %41 : vector<32x1xi1> to vector<32x1xi1>
    %43 = vector.broadcast %42 : vector<32x1xi1> to vector<32x8xi1>
    %44 = vector.broadcast %cst_15 : f32 to vector<32x8xf32>
    %45 = arith.select %43, %36, %44 : vector<32x8xi1>, vector<32x8xf32>
    %c16 = arith.constant 16 : index
    %c0_16 = arith.constant 0 : index
    %46 = vector.load %arg1[%c16, %c0_16] : memref<48x16xf32, #tpu.memory_space<vmem>>, vector<8x8xf32>
    %cst_17 = arith.constant dense<0.000000e+00> : vector<32x8xf32>
    %47 = tpu.matmul %45, %46, %cst_17 {dimension_numbers = #tpu.dot_dimension_numbers<[1], [0], [0], [1], [0, 0, 1, 1], [], []>} : vector<32x8xf32>, vector<8x8xf32>, vector<32x8xf32> -> vector<32x8xf32>
    %48 = arith.addf %35, %47 : vector<32x8xf32>
    %c24 = arith.constant 24 : index
    %c0_18 = arith.constant 0 : index
    %49 = vector.load %arg1[%c24, %c0_18] : memref<48x16xf32, #tpu.memory_space<vmem>>, vector<8x8xf32>
    %cst_19 = arith.constant dense<0.000000e+00> : vector<32x8xf32>
    %50 = tpu.matmul %14, %49, %cst_19 {dimension_numbers = #tpu.dot_dimension_numbers<[1], [0], [0], [1], [0, 0, 1, 1], [], []>} : vector<32x8xf32>, vector<8x8xf32>, vector<32x8xf32> -> vector<32x8xf32>
    %51 = arith.addf %48, %50 : vector<32x8xf32>
    %c31_i32 = arith.constant 31 : i32
    %52 = tpu.dynamic_rotate %14 by %c31_i32 dim 0 : vector<32x8xf32>, i32 -> vector<32x8xf32>
    %c-1_i32 = arith.constant -1 : i32
    %53 = vector.broadcast %c-1_i32 : i32 to vector<32x1xi32>
    %54 = arith.cmpi sge, %34, %53 : vector<32x1xi32>
    %c15_i32 = arith.constant 15 : i32
    %55 = vector.broadcast %c15_i32 : i32 to vector<32x1xi32>
    %56 = arith.cmpi slt, %34, %55 : vector<32x1xi32>
    %57 = arith.andi %54, %56 : vector<32x1xi1>
    %cst_20 = arith.constant 0.000000e+00 : f32
    %58 = vector.shape_cast %57 : vector<32x1xi1> to vector<32x1xi1>
    %59 = vector.broadcast %58 : vector<32x1xi1> to vector<32x8xi1>
    %60 = vector.broadcast %cst_20 : f32 to vector<32x8xf32>
    %61 = arith.select %59, %52, %60 : vector<32x8xi1>, vector<32x8xf32>
    %c32 = arith.constant 32 : index
    %c0_21 = arith.constant 0 : index
    %62 = vector.load %arg1[%c32, %c0_21] : memref<48x16xf32, #tpu.memory_space<vmem>>, vector<8x8xf32>
    %cst_22 = arith.constant dense<0.000000e+00> : vector<32x8xf32>
    %63 = tpu.matmul %61, %62, %cst_22 {dimension_numbers = #tpu.dot_dimension_numbers<[1], [0], [0], [1], [0, 0, 1, 1], [], []>} : vector<32x8xf32>, vector<8x8xf32>, vector<32x8xf32> -> vector<32x8xf32>
    %64 = arith.addf %51, %63 : vector<32x8xf32>
    %65 = vector.broadcast %2 : vector<1x8xf32> to vector<32x8xf32>
    %66 = arith.mulf %64, %65 : vector<32x8xf32>
    %67 = vector.broadcast %3 : vector<1x8xf32> to vector<32x8xf32>
    %68 = arith.addf %66, %67 : vector<32x8xf32>
    %cst_23 = arith.constant 0.000000e+00 : f32
    %69 = vector.broadcast %cst_23 : f32 to vector<32x8xf32>
    %70 = arith.maximumf %68, %69 : vector<32x8xf32>
    %71 = arith.addf %70, %17 : vector<32x8xf32>
    %cst_24 = arith.constant 0.000000e+00 : f32
    %72 = vector.broadcast %cst_24 : f32 to vector<32x8xf32>
    %73 = arith.maximumf %71, %72 : vector<32x8xf32>
    %c0_25 = arith.constant 0 : index
    %c0_26 = arith.constant 0 : index
    %74 = vector.load %arg2[%c0_25, %c0_26] : memref<32x8xf32, #tpu.memory_space<vmem>>, vector<32x8xf32>
    tpu.vector_store %arg2[%c0_25, %c0_26], %73 {strides = array<i32>} : memref<32x8xf32, #tpu.memory_space<vmem>>, vector<32x8xf32>,
    return
  }
}

</mosaic_0001>

<llo_original>
// kernel: temporal_block_pallas.1
$region0: #{temporal_block_pallas.1}
  #allocation0 [shape = 'u32[]', space=smem, size = 0x4, offset = 0x4, fixed_abs, tag = 'smem constant byte address 0x4 - core index']
  #allocation1 [shape = 'u32[72,128]{1,0:T(1,128)}', space=vmem, size = 0x9000, scoped, tag = 'internal scratch']
  %s0 = inlined_call_operand.vmem [shape: f32[32,12], index: 0, kind: input, shape index: {}]
  %s1 = inlined_call_operand.vmem [shape: f32[48,16], index: 1, kind: input, shape index: {}]
  %s2 = inlined_call_operand.vmem [shape: f32[32,8], index: 2, kind: output, shape index: {}]
  %s3 = sld [smem:[#allocation0]]
  $region18: #{temporal_block_pallas.1} parent=0
    _
  %s5 = ssub.s32 1, %s3
  %s6 = scalar_select 0, %s5, %s3
  // Predicated region
  $region2: #{temporal_block_pallas.1} parent=0 // pred_check
    _
  $region3: #{temporal_block_pallas.1} parent=0 // pred_check_branch
    %8 = sbr.rel (0) target = $region5
  $region4: #{temporal_block_pallas.1} parent=0 // pred_region
    _
  $region5: #{temporal_block_pallas.1} parent=0 // pred_fallthru
    _
  // Predicated region
  $region6: #{temporal_block_pallas.1} parent=0 // pred_check
    _
  $region7: #{temporal_block_pallas.1} parent=0 // pred_check_branch
    %10 = sbr.rel (0) target = $region9
  $region8: #{temporal_block_pallas.1} parent=0 // pred_region
    _
  $region9: #{temporal_block_pallas.1} parent=0 // pred_fallthru
    _
  %v11 = vld [vmem:[%s1 + $0x28] sm:$0x1]
  %v12 = vld [vmem:[%s1 + $0x29] sm:$0x1]
  %v13 = vld [vmem:[%s1 + $0x2a] sm:$0x1]
  %v14 = vld [vmem:[%s1 + $0x2b] sm:$0x1]
  %v15 = vld [vmem:[%s1 + $0x2c] sm:$0x1]
  %v16 = vld [vmem:[%s0] sm:$0xff]
  %v17 = vld [vmem:[%s0 + $0x8] sm:$0xff]
  %v18 = vld [vmem:[%s0 + $0x10] sm:$0xff]
  %v19 = vld [vmem:[%s0 + $0x18] sm:$0xff]
  %v20 = vld [vmem:[%s1] sm:$0xff]
  %v21 = vld [vmem:[%s1 + $0x8] sm:$0xf]
  %vm22 = vcmask 97280
  %v24 = vsel %vm22, %v16, 0
  %v27 = vsel %vm22, %v17, 0
  %v30 = vsel %vm22, %v18, 0
  %v33 = vsel %vm22, %v19, 0
  %vm35 = vcmask 1043456
  %v37 = vsel %vm35, %v21, 0
  %39 = vmatpush.msra.mxu0 0.0
  %40 = vmatpush.msra.mxu0 0.0
  %41 = vmatpush.msra.mxu0 0.0
  %42 = vmatpush.msra.mxu0 0.0
  %43 = vmatpush.msra.mxu0 0.0
  %44 = vmatpush.msra.mxu0 0.0
  %45 = vmatpush.msra.mxu0 0.0
  %46 = vmatpush.msra.mxu0 0.0
  %47 = vmatpush.msra.mxu0 0.0
  %48 = vmatpush.msra.mxu0 0.0
  %49 = vmatpush.msra.mxu0 0.0
  %50 = vmatpush.msra.mxu0 0.0
  %51 = vmatpush.msra.mxu0 0.0
  %52 = vmatpush.msra.mxu0 0.0
  %53 = vmatpush.msra.mxu0 %v37
  %54 = vmatpush.msra.mxu0 %v20
  %55 = vmatmul.f32.gmra.mxu0 %v24
  %v56 = vpop.f32.mrf.mxu0
  %v57 = vadd.f32 0.0, %v56
  %58 = vmatmul.f32.gmra.mxu0 %v27
  %v59 = vpop.f32.mrf.mxu0
  %v60 = vadd.f32 0.0, %v59
  %61 = vmatmul.f32.gmra.mxu0 %v30
  %v62 = vpop.f32.mrf.mxu0
  %v63 = vadd.f32 0.0, %v62
  %64 = vmatmul.f32.gmra.mxu0 %v33
  %v65 = vpop.f32.mrf.mxu0
  %v66 = vadd.f32 0.0, %v65
  %67 = vdwg.mxu0
  %v68 = vperm.slane %v11, 0
  %v69 = vmul.f32 %v57, %v68
  %v70 = vmul.f32 %v60, %v68
  %v71 = vmul.f32 %v63, %v68
  %v72 = vmul.f32 %v66, %v68
  %v73 = vperm.slane %v12, 0
  %v74 = vadd.f32 %v69, %v73
  %v75 = vadd.f32 %v70, %v73
  %v76 = vadd.f32 %v71, %v73
  %v77 = vadd.f32 %v72, %v73
  %v78 = vmax.f32 %v74, 0.0
  %v79 = vmax.f32 %v75, 0.0
  %v80 = vmax.f32 %v76, 0.0
  %v81 = vmax.f32 %v77, 0.0
  %v82 = vperm.slane %v15, 0
  %84 = vrot.lane.b32.xlu0 %v82, 8
  %v85 = vpop.permute.xlu0 %84
  %v87 = vadd.f32 %v57, %v85
  %v88 = vadd.f32 %v60, %v85
  %v89 = vadd.f32 %v63, %v85
  %v90 = vadd.f32 %v66, %v85
  %v91 = vlaneseq
  %v92 = vshrl.u32 %v91, 7
  %v93 = vadd.s32 %v92, 8
  %v94 = vadd.s32 %v92, 16
  %v95 = vadd.s32 %v92, 24
  %vm96 = vcmp.lt.s32.totalorder %v92, 0
  %v97 = vsub.s32 0, %v92
  %v98 = vsel %vm96, %v97, %v92
  %v99 = vshrl.u32 %v98, 4
  %v100 = vand.u32 %v98, 15
  %v101 = vsub.s32 0, %v100
  %v102 = vsel %vm96, %v101, %v100
  %vm103 = vcmp.lt.s32.totalorder %v93, 0
  %v104 = vsub.s32 0, %v93
  %v105 = vsel %vm103, %v104, %v93
  %v106 = vshrl.u32 %v105, 4
  %v107 = vand.u32 %v105, 15
  %v108 = vsub.s32 0, %v107
  %v109 = vsel %vm103, %v108, %v107
  %vm110 = vcmp.lt.s32.totalorder %v94, 0
  %v111 = vsub.s32 0, %v94
  %v112 = vsel %vm110, %v111, %v94
  %v113 = vshrl.u32 %v112, 4
  %v114 = vand.u32 %v112, 15
  %v115 = vsub.s32 0, %v114
  %v116 = vsel %vm110, %v115, %v114
  %vm117 = vcmp.lt.s32.totalorder %v95, 0
  %v118 = vsub.s32 0, %v95
  %v119 = vsel %vm117, %v118, %v95
  %v120 = vshrl.u32 %v119, 4
  %v121 = vand.u32 %v119, 15
  %v122 = vsub.s32 0, %v121
  %v123 = vsel %vm117, %v122, %v121
  %vm124 = vcmp.ne.s32.totalorder %v102, 0
  %vm125 = vcmp.ne.s32.totalorder %v109, 0
  %vm126 = vcmp.ne.s32.totalorder %v116, 0
  %vm127 = vcmp.ne.s32.totalorder %v123, 0
  %vm128 = vcmp.lt.s32.totalorder %v102, 0
  %vm129 = vcmp.lt.s32.totalorder %v109, 0
  %vm130 = vcmp.lt.s32.totalorder %v116, 0
  %vm131 = vcmp.lt.s32.totalorder %v123, 0
  %vm132 = vmand %vm128, %vm124
  %vm133 = vmand %vm129, %vm125
  %vm134 = vmand %vm130, %vm126
  %vm135 = vmand %vm131, %vm127
  %v136 = vadd.s32 %v102, 16
  %v137 = vadd.s32 %v109, 16
  %v138 = vadd.s32 %v116, 16
  %v139 = vadd.s32 %v123, 16
  %v140 = vsel %vm132, %v136, %v102
  %v141 = vsel %vm133, %v137, %v109
  %v142 = vsel %vm134, %v138, %v116
  %v143 = vsel %vm135, %v139, %v123
  %v144 = vrot.slane %v78, 7
  %v145 = vrot.slane %v79, 7
  %v146 = vrot.slane %v80, 7
  %v147 = vrot.slane %v81, 7
  %vm148 = vcmp.lt.s32.totalorder %v92, 1
  %v149 = vsel %vm148, %v146, %v147
  %v150 = vsel %vm148, %v145, %v146
  %v151 = vsel %vm148, %v144, %v145
  %v152 = vsel %vm148, %v147, %v144
  %vm153 = vcmp.ge.s32.totalorder %v140, 1
  %vm154 = vcmp.ge.s32.totalorder %v141, 1
  %vm155 = vcmp.ge.s32.totalorder %v142, 1
  %vm156 = vcmp.ge.s32.totalorder %v143, 1
  %vm157 = vcmp.lt.s32.totalorder %v140, 17
  %vm158 = vcmp.lt.s32.totalorder %v141, 17
  %vm159 = vcmp.lt.s32.totalorder %v142, 17
  %vm160 = vcmp.lt.s32.totalorder %v143, 17
  %vm161 = vmand %vm153, %vm157
  %vm162 = vmand %vm154, %vm158
  %vm163 = vmand %vm155, %vm159
  %vm164 = vmand %vm156, %vm160
  %v165 = vsel %vm161, 1, 0
  %v166 = vsel %vm162, 1, 0
  %v167 = vsel %vm163, 1, 0
  %v168 = vsel %vm164, 1, 0
  %vm169 = vcmp.eq.s32.totalorder %v165, 1
  %vm170 = vcmp.eq.s32.totalorder %v166, 1
  %vm171 = vcmp.eq.s32.totalorder %v167, 1
  %vm172 = vcmp.eq.s32.totalorder %v168, 1
  %v173 = vsel %vm169, %v152, 0.0
  %v174 = vsel %vm170, %v151, 0.0
  %v175 = vsel %vm171, %v150, 0.0
  %v176 = vsel %vm172, %v149, 0.0
  %v177 = vld [vmem:[%s1 + $0x10] sm:$0xff]
  %v178 = vld [vmem:[%s1 + $0x18] sm:$0xff]
  %vm179 = vcmask 64512
  %v181 = vsel %vm179, %v78, 0
  %v184 = vsel %vm179, %v79, 0
  %v187 = vsel %vm179, %v80, 0
  %v190 = vsel %vm179, %v81, 0
  %192 = vmatpush.msra.mxu0 0.0
  %193 = vmatpush.msra.mxu0 0.0
  %194 = vmatpush.msra.mxu0 0.0
  %195 = vmatpush.msra.mxu0 0.0
  %196 = vmatpush.msra.mxu0 0.0
  %197 = vmatpush.msra.mxu0 0.0
  %198 = vmatpush.msra.mxu0 0.0
  %199 = vmatpush.msra.mxu0 0.0
  %200 = vmatpush.msra.mxu0 0.0
  %201 = vmatpush.msra.mxu0 0.0
  %202 = vmatpush.msra.mxu0 0.0
  %203 = vmatpush.msra.mxu0 0.0
  %204 = vmatpush.msra.mxu0 0.0
  %205 = vmatpush.msra.mxu0 0.0
  %206 = vmatpush.msra.mxu0 0.0
  %207 = vmatpush.msra.mxu0 %v178
  %208 = vmatmul.f32.gmra.mxu0 %v181
  %v209 = vpop.f32.mrf.mxu0
  %v210 = vadd.f32 0.0, %v209
  %211 = vmatmul.f32.gmra.mxu0 %v184
  %v212 = vpop.f32.mrf.mxu0
  %v213 = vadd.f32 0.0, %v212
  %214 = vmatmul.f32.gmra.mxu0 %v187
  %v215 = vpop.f32.mrf.mxu0
  %v216 = vadd.f32 0.0, %v215
  %217 = vmatmul.f32.gmra.mxu0 %v190
  %v218 = vpop.f32.mrf.mxu0
  %v219 = vadd.f32 0.0, %v218
  %220 = vdwg.mxu0
  %v222 = vsel %vm179, %v173, 0
  %v225 = vsel %vm179, %v174, 0
  %v228 = vsel %vm179, %v175, 0
  %v231 = vsel %vm179, %v176, 0
  %233 = vmatpush.msra.mxu0 0.0
  %234 = vmatpush.msra.mxu0 0.0
  %235 = vmatpush.msra.mxu0 0.0
  %236 = vmatpush.msra.mxu0 0.0
  %237 = vmatpush.msra.mxu0 0.0
  %238 = vmatpush.msra.mxu0 0.0
  %239 = vmatpush.msra.mxu0 0.0
  %240 = vmatpush.msra.mxu0 0.0
  %241 = vmatpush.msra.mxu0 0.0
  %242 = vmatpush.msra.mxu0 0.0
  %243 = vmatpush.msra.mxu0 0.0
  %244 = vmatpush.msra.mxu0 0.0
  %245 = vmatpush.msra.mxu0 0.0
  %246 = vmatpush.msra.mxu0 0.0
  %247 = vmatpush.msra.mxu0 0.0
  %248 = vmatpush.msra.mxu0 %v177
  %249 = vmatmul.f32.gmra.mxu0 %v222
  %v250 = vpop.f32.mrf.mxu0
  %v251 = vadd.f32 %v210, %v250
  %252 = vmatmul.f32.gmra.mxu0 %v225
  %v253 = vpop.f32.mrf.mxu0
  %v254 = vadd.f32 %v213, %v253
  %255 = vmatmul.f32.gmra.mxu0 %v228
  %v256 = vpop.f32.mrf.mxu0
  %v257 = vadd.f32 %v216, %v256
  %258 = vmatmul.f32.gmra.mxu0 %v231
  %v259 = vpop.f32.mrf.mxu0
  %v260 = vadd.f32 %v219, %v259
  %261 = vdwg.mxu0
  %v262 = vrot.slane %v78, 1
  %v263 = vrot.slane %v79, 1
  %v264 = vrot.slane %v80, 1
  %v265 = vrot.slane %v81, 1
  %vm266 = vcmp.lt.s32.totalorder %v92, 7
  %v267 = vsel %vm266, %v264, %v265
  %v268 = vsel %vm266, %v263, %v264
  %v269 = vsel %vm266, %v262, %v263
  %v270 = vsel %vm266, %v265, %v262
  %vm271 = vcmp.ge.s32.totalorder %v140, 4294967295
  %vm272 = vcmp.ge.s32.totalorder %v141, 4294967295
  %vm273 = vcmp.ge.s32.totalorder %v142, 4294967295
  %vm274 = vcmp.ge.s32.totalorder %v143, 4294967295
  %vm275 = vcmp.lt.s32.totalorder %v140, 15
  %vm276 = vcmp.lt.s32.totalorder %v141, 15
  %vm277 = vcmp.lt.s32.totalorder %v142, 15
  %vm278 = vcmp.lt.s32.totalorder %v143, 15
  %vm279 = vmand %vm271, %vm275
  %vm280 = vmand %vm272, %vm276
  %vm281 = vmand %vm273, %vm277
  %vm282 = vmand %vm274, %vm278
  %v283 = vsel %vm279, 1, 0
  %v284 = vsel %vm280, 1, 0
  %v285 = vsel %vm281, 1, 0
  %v286 = vsel %vm282, 1, 0
  %vm287 = vcmp.eq.s32.totalorder %v283, 1
  %vm288 = vcmp.eq.s32.totalorder %v284, 1
  %vm289 = vcmp.eq.s32.totalorder %v285, 1
  %vm290 = vcmp.eq.s32.totalorder %v286, 1
  %v291 = vsel %vm287, %v269, 0.0
  %v292 = vsel %vm288, %v268, 0.0
  %v293 = vsel %vm289, %v267, 0.0
  %v294 = vsel %vm290, %v270, 0.0
  %v295 = vld [vmem:[%s1 + $0x20] sm:$0xff]
  %v297 = vsel %vm179, %v291, 0
  %v300 = vsel %vm179, %v292, 0
  %v303 = vsel %vm179, %v293, 0
  %v306 = vsel %vm179, %v294, 0
  %308 = vmatpush.msra.mxu0 0.0
  %309 = vmatpush.msra.mxu0 0.0
  %310 = vmatpush.msra.mxu0 0.0
  %311 = vmatpush.msra.mxu0 0.0
  %312 = vmatpush.msra.mxu0 0.0
  %313 = vmatpush.msra.mxu0 0.0
  %314 = vmatpush.msra.mxu0 0.0
  %315 = vmatpush.msra.mxu0 0.0
  %316 = vmatpush.msra.mxu0 0.0
  %317 = vmatpush.msra.mxu0 0.0
  %318 = vmatpush.msra.mxu0 0.0
  %319 = vmatpush.msra.mxu0 0.0
  %320 = vmatpush.msra.mxu0 0.0
  %321 = vmatpush.msra.mxu0 0.0
  %322 = vmatpush.msra.mxu0 0.0
  %323 = vmatpush.msra.mxu0 %v295
  %324 = vmatmul.f32.gmra.mxu0 %v297
  %v325 = vpop.f32.mrf.mxu0
  %v326 = vadd.f32 0.0, %v325
  %327 = vmatmul.f32.gmra.mxu0 %v300
  %v328 = vpop.f32.mrf.mxu0
  %v329 = vadd.f32 0.0, %v328
  %330 = vmatmul.f32.gmra.mxu0 %v303
  %v331 = vpop.f32.mrf.mxu0
  %v332 = vadd.f32 0.0, %v331
  %333 = vmatmul.f32.gmra.mxu0 %v306
  %v334 = vpop.f32.mrf.mxu0
  %v335 = vadd.f32 0.0, %v334
  %336 = vdwg.mxu0
  %v337 = vadd.f32 %v251, %v326
  %v338 = vadd.f32 %v254, %v329
  %v339 = vadd.f32 %v257, %v332
  %v340 = vadd.f32 %v260, %v335
  %v341 = vperm.slane %v13, 0
  %v342 = vmul.f32 %v337, %v341
  %v343 = vmul.f32 %v338, %v341
  %v344 = vmul.f32 %v339, %v341
  %v345 = vmul.f32 %v340, %v341
  %v346 = vperm.slane %v14, 0
  %v347 = vadd.f32 %v342, %v346
  %v348 = vadd.f32 %v343, %v346
  %v349 = vadd.f32 %v344, %v346
  %v350 = vadd.f32 %v345, %v346
  %v351 = vmax.f32 %v347, 0.0
  %v352 = vmax.f32 %v348, 0.0
  %v353 = vmax.f32 %v349, 0.0
  %v354 = vmax.f32 %v350, 0.0
  %359 = vrot.lane.b32.xlu0 %v87, 120
  %v360 = vpop.permute.xlu0 %359
  %361 = vrot.lane.b32.xlu0 %v88, 120
  %v362 = vpop.permute.xlu0 %361
  %363 = vrot.lane.b32.xlu0 %v89, 120
  %v364 = vpop.permute.xlu0 %363
  %365 = vrot.lane.b32.xlu0 %v90, 120
  %v366 = vpop.permute.xlu0 %365
  %v371 = vadd.f32 %v351, %v360
  %v372 = vadd.f32 %v352, %v362
  %v373 = vadd.f32 %v353, %v364
  %v374 = vadd.f32 %v354, %v366
  %v375 = vmax.f32 %v371, 0.0
  %v376 = vmax.f32 %v372, 0.0
  %v377 = vmax.f32 %v373, 0.0
  %v378 = vmax.f32 %v374, 0.0
  %379 = vst.msk [vmem:[%s2] sm:$0xff] %vm179, %v375
  %380 = vst.msk [vmem:[%s2 + $0x8] sm:$0xff] %vm179, %v376
  %381 = vst.msk [vmem:[%s2 + $0x10] sm:$0xff] %vm179, %v377
  %382 = vst.msk [vmem:[%s2 + $0x18] sm:$0xff] %vm179, %v378
  // Predicated region
  $region10: #{temporal_block_pallas.1} parent=0 // pred_check
    _
  $region11: #{temporal_block_pallas.1} parent=0 // pred_check_branch
    %384 = sbr.rel (0) target = $region13
  $region12: #{temporal_block_pallas.1} parent=0 // pred_region
    _
  $region13: #{temporal_block_pallas.1} parent=0 // pred_fallthru
    _
  // Predicated region
  $region14: #{temporal_block_pallas.1} parent=0 // pred_check
    _
  $region15: #{temporal_block_pallas.1} parent=0 // pred_check_branch
    %386 = sbr.rel (0) target = $region17
  $region16: #{temporal_block_pallas.1} parent=0 // pred_region
    _
  $region17: #{temporal_block_pallas.1} parent=0 // pred_fallthru
    _

</llo_original>
